<compile_context>
chip_gen: v6e
topology: v6e:2x2x1
jax: 0.10.0
libtpu: 0.0.40
codegen_flags: <defaults>
</compile_context>

<pallas_src>
import functools

import jax
import jax.numpy as jnp
from jax.experimental import pallas as pl
from jax.experimental.pallas import tpu as pltpu


def _round_up(x, m):
    return (x + m - 1) // m * m


def _chip_profile():
    """Generation-aware knobs: cores to shard over, scoped-VMEM cap, block bytes."""
    kind = ""
    try:
        kind = jax.devices()[0].device_kind.lower()
    except Exception:
        pass
    if "v7" in kind or "7x" in kind:
        # v7x: 2 TensorCores/chip, 64 MiB VMEM per TC (32 MiB scoped default).
        return {"cores": 2, "vmem_cap": 48 << 20, "block_bytes": 12 << 20}
    if "v6" in kind:
        # v6e: 1 TC, 128 MiB VMEM (32 MiB scoped default).
        return {"cores": 1, "vmem_cap": 96 << 20, "block_bytes": 12 << 20}
    if "v5" in kind:
        # v5e: 1 TC, 128 MiB VMEM but only 16 MiB scoped default -> raise it.
        return {"cores": 1, "vmem_cap": 96 << 20, "block_bytes": 8 << 20}
    # Unknown chip: conservative.
    return {"cores": 1, "vmem_cap": 48 << 20, "block_bytes": 8 << 20}


def _loss_kernel(pred_ref, react_ref, mask_ref, out_ref, acc_ref, cnt_ref, *,
                 val, tile_b, tile_l, tiles_per_shard, num_col_tiles,
                 batch, seq_len, check_rows, check_cols):
    i = pl.program_id(0)     # shard axis ("parallel"; one per v7x TensorCore)
    bj = pl.program_id(1)    # batch-tile axis ("arbitrary", reduction)
    j = pl.program_id(2)     # column-tile axis ("arbitrary", reduction)

    @pl.when((bj == 0) & (j == 0))
    def _():
        acc_ref[...] = jnp.zeros_like(acc_ref)
        cnt_ref[...] = jnp.zeros_like(cnt_ref)

    # Global (unclamped) column tile index. t >= num_col_tiles means this is
    # the clamp-duplicated tile of the last shard: its loaded data re-reads
    # the final real tile and is fully masked out by the column bound below.
    t = i * tiles_per_shard + j

    def accumulate(mask_rows, mask_cols):
        # Upcast AFTER the load so bf16 inputs stream at 2 B/elem in HBM.
        p = pred_ref[...].astype(jnp.float32)
        y = react_ref[...].astype(jnp.float32)
        m = mask_ref[...] != 0
        if mask_cols:
            col = t * tile_l + jax.lax.broadcasted_iota(
                jnp.int32, (tile_b, tile_l), 1)
            m = m & (col < seq_len)
        if mask_rows:
            row = bj * tile_b + jax.lax.broadcasted_iota(
                jnp.int32, (tile_b, tile_l), 0)
            m = m & (row < batch)
        if val:
            p = jnp.clip(p, 0.0, 1.0)
            y = jnp.clip(y, 0.0, 1.0)
        diff = jnp.abs(p - y)                               # L1, reduction='none'
        if not val:
            clip_mask = ((p <= 0.0) & (y <= 0.0)) | ((p >= 1.0) & (y >= 1.0))
            diff = jnp.where(clip_mask, 0.0, diff)          # l1_loss[mask] = 0
        valid = m & jnp.logical_not(jnp.isnan(diff))        # ~isnan filter
        # In-block reduce (lane axis then sublane axis); only two (1,1)
        # scalars are accumulated in VMEM per step -- no full-block scratch.
        s = jnp.sum(jnp.where(valid, diff, 0.0), axis=1, keepdims=True)
        c = jnp.sum(valid.astype(jnp.float32), axis=1, keepdims=True)
        acc_ref[...] += jnp.sum(s, axis=0, keepdims=True)
        cnt_ref[...] += jnp.sum(c, axis=0, keepdims=True)

    if check_rows or check_cols:
        conds = []
        if check_cols:
            conds.append(t >= num_col_tiles - 1)
        if check_rows:
            conds.append(bj == pl.num_programs(1) - 1)
        is_edge = conds[0]
        for cnd in conds[1:]:
            is_edge = is_edge | cnd

        @pl.when(is_edge)
        def _():
            accumulate(check_rows, check_cols)

        @pl.when(jnp.logical_not(is_edge))
        def _():
            accumulate(False, False)        # hot interior path: no iota/compare
    else:
        accumulate(False, False)

    # Finalize once per shard: emit one lane-dense (8,128) slab with
    # [0,0] = partial sum, [0,1] = partial valid count.
    @pl.when((bj == pl.num_programs(1) - 1) & (j == pl.num_programs(2) - 1))
    def _():
        row = jax.lax.broadcasted_iota(jnp.int32, (8, 128), 0)
        lane = jax.lax.broadcasted_iota(jnp.int32, (8, 128), 1)
        first = row == 0
        out_ref[...] = jnp.where(first & (lane == 0), acc_ref[...],
                                 jnp.where(first & (lane == 1), cnt_ref[...], 0.0))


def _reference(y_pred, react, mask, val=False):
    """Pure-JAX reference mirroring the torch semantics."""
    p = y_pred.astype(jnp.float32)
    y = react.astype(jnp.float32)
    if val:
        p = jnp.clip(p, 0.0, 1.0)
        y = jnp.clip(y, 0.0, 1.0)
    diff = jnp.abs(p - y)
    if not val:
        cm = ((p <= 0) & (y <= 0)) | ((p >= 1) & (y >= 1))
        diff = jnp.where(cm, 0.0, diff)
    valid = (mask != 0) & jnp.logical_not(jnp.isnan(diff))
    total = jnp.sum(jnp.where(valid, diff, 0.0))
    count = jnp.sum(valid.astype(jnp.float32))
    return total / count


def my_loss(y_pred, react, mask, val=False, *, tile_b=None, tile_l=None,
            num_shards=None, use_pallas=True):
    """Pallas equivalent of MyLoss.forward; returns {'loss': scalar}."""
    B, L = y_pred.shape
    # Mirror torch's mask[:, :y_pred.shape[1]] slice (react/mask may be wider).
    if react.shape[1] != L:
        react = react[:, :L]
    if mask.shape[1] != L:
        mask = mask[:, :L]

    if not use_pallas:
        # For tiny problems the pallas_call launch overhead dwarfs the data.
        return {"loss": _reference(y_pred, react, mask, val=val)}

    # Stream pred/react in their native dtypes (upcast happens in-kernel).
    # Mask: integer/float callers stream their native dtype (compared != 0
    # in-kernel); bool is converted to int8 (1 B -> 1 B).
    # TODO(synk): pass bool masks straight through once bool VMEM refs are
    # universally supported by Mosaic.
    mask_arr = mask.astype(jnp.int8) if mask.dtype == jnp.bool_ else mask

    prof = _chip_profile()
    bytes_per_elem = (y_pred.dtype.itemsize + react.dtype.itemsize
                      + mask_arr.dtype.itemsize)
    target_elems = max(8 * 128, prof["block_bytes"] // bytes_per_elem)

    L_pad = _round_up(L, 128)
    min_tile_l = 512   # keep DMA rows >= 2 KiB when batch-tiling

    # --- block sizing: prefer full batch rows; tile the batch only when B is
    # so large that tile_l would collapse below 512 lanes. ---
    if tile_l is None and tile_b is None:
        cand_l = (target_elems // max(B, 1)) // 128 * 128
        if cand_l >= min(L_pad, min_tile_l):
            tile_b = B
            tile_l = min(L_pad, max(128, cand_l))
        else:
            tile_l = min(L_pad, min_tile_l)
            tile_b = max(8, (target_elems // tile_l) // 8 * 8)
    if tile_l is None:
        tile_l = min(L_pad, max(128, (target_elems // max(tile_b, 1)) // 128 * 128))
    if tile_b is None:
        tile_b = B
    tile_l = min(_round_up(tile_l, 128), L_pad)
    tile_b = B if tile_b >= B else _round_up(tile_b, 8)

    num_b_tiles = pl.cdiv(B, tile_b)
    num_col_tiles = pl.cdiv(L, tile_l)
    if num_shards is None:
        num_shards = prof["cores"]           # 2 only on v7x; 1 on v5e/v6e
    num_shards = max(1, min(num_shards, num_col_tiles))
    tiles_per_shard = pl.cdiv(num_col_tiles, num_shards)

    # Static flags: column masking needed for a partial last tile and/or the
    # clamp-duplicated tile; row masking for a partial last batch tile.
    check_cols = (num_col_tiles * tile_l != L) or \
                 (num_shards * tiles_per_shard != num_col_tiles)
    check_rows = (num_b_tiles * tile_b != B)

    def in_map(i, bj, j):
        # Clamp so an over-hanging tile of the last shard re-reads the final
        # real tile (its contribution is fully masked out in the kernel).
        return (bj, jnp.minimum(i * tiles_per_shard + j, num_col_tiles - 1))

    kernel = functools.partial(
        _loss_kernel, val=bool(val), tile_b=tile_b, tile_l=tile_l,
        tiles_per_shard=tiles_per_shard, num_col_tiles=num_col_tiles,
        batch=B, seq_len=L, check_rows=check_rows, check_cols=check_cols)

    block_bytes = tile_b * tile_l * bytes_per_elem
    vmem_limit = int(min(prof["vmem_cap"],
                         max(32 << 20, 2 * block_bytes + (4 << 20))))

    partials = pl.pallas_call(
        kernel,
        out_shape=jax.ShapeDtypeStruct((num_shards, 8, 128), jnp.float32),
        grid_spec=pltpu.PrefetchScalarGridSpec(
            num_scalar_prefetch=0,
            grid=(num_shards, num_b_tiles, tiles_per_shard),
            in_specs=[
                pl.BlockSpec((tile_b, tile_l), in_map),
                pl.BlockSpec((tile_b, tile_l), in_map),
                pl.BlockSpec((tile_b, tile_l), in_map),
            ],
            out_specs=pl.BlockSpec((None, 8, 128), lambda i, bj, j: (i, 0, 0)),
            scratch_shapes=[
                pltpu.VMEM((1, 1), jnp.float32),   # running sum   (per shard)
                pltpu.VMEM((1, 1), jnp.float32),   # running count (per shard)
            ],
        ),
        compiler_params=pltpu.CompilerParams(
            dimension_semantics=("parallel", "arbitrary", "arbitrary"),
            vmem_limit_bytes=vmem_limit,
        ),
    )(y_pred, react, mask_arr)

    total = jnp.sum(partials[:, 0, 0])
    count = jnp.sum(partials[:, 0, 1])
    # NOTE: count accumulates in f32 -- exact up to 2^24 (~16.7M) valid
    # elements, plenty for realistic RNA batches. NaN if no valid element,
    # exactly like torch's mean over an empty tensor.
    return {"loss": total / count}


if __name__ == "__main__":
    key = jax.random.PRNGKey(0)
    k1, k2, k3, k4 = jax.random.split(key, 4)

    # Small shape; L deliberately NOT a multiple of 128 to exercise the
    # partial-tile masking path.
    B, L = 8, 300
    y_pred = jax.random.uniform(k1, (B, L), jnp.float32, -0.3, 1.3)
    react = jax.random.uniform(k2, (B, L), jnp.float32, -0.3, 1.3)
    # Sprinkle NaNs into the targets (as real reactivity data has).
    react = jnp.where(jax.random.bernoulli(k3, 0.1, (B, L)), jnp.nan, react)
    # Sequence validity mask (~70% True).
    mask = jax.random.bernoulli(k4, 0.7, (B, L))

    # Train and val paths, auto tiling (single-block grid).
    for val in (False, True):
        out = my_loss(y_pred, react, mask, val=val)
        loss = jax.block_until_ready(out["loss"])
        ref = jax.block_until_ready(_reference(y_pred, react, mask, val=val))
        assert jnp.isfinite(loss), f"loss not finite (val={val})"
        assert jnp.allclose(loss, ref, rtol=1e-5, atol=1e-6), (val, loss, ref)

    # bf16 inputs streamed natively (2 B/elem), upcast in-kernel.
    yp_bf = y_pred.astype(jnp.bfloat16)
    rc_bf = react.astype(jnp.bfloat16)
    out = my_loss(yp_bf, rc_bf, mask, val=False)
    loss = jax.block_until_ready(out["loss"])
    ref = jax.block_until_ready(_reference(yp_bf, rc_bf, mask, val=False))
    assert jnp.allclose(loss, ref, rtol=1e-4, atol=1e-5), (loss, ref)

    # Forced tiny tiles: multi-step reduction over batch AND column tiles,
    # 2-shard axis with a clamp-duplicated column tile, and row masking of
    # the partial last batch tile (12 rows, tile_b=8).
    k5, k6, k7, k8 = jax.random.split(jax.random.PRNGKey(1), 4)
    B2, L2 = 12, 300
    yp2 = jax.random.uniform(k5, (B2, L2), jnp.float32, -0.3, 1.3)
    rc2 = jax.random.uniform(k6, (B2, L2), jnp.float32, -0.3, 1.3)
    rc2 = jnp.where(jax.random.bernoulli(k7, 0.1, (B2, L2)), jnp.nan, rc2)
    m2 = jax.random.bernoulli(k8, 0.7, (B2, L2))
    for val in (False, True):
        out = my_loss(yp2, rc2, m2, val=val, tile_b=8, tile_l=128, num_shards=2)
        loss = jax.block_until_ready(out["loss"])
        ref = jax.block_until_ready(_reference(yp2, rc2, m2, val=val))
        assert jnp.allclose(loss, ref, rtol=1e-5, atol=1e-6), (val, loss, ref)

    print("KERNEL_OK")
</pallas_src>

<mosaic_0001>
module attributes {stable_mosaic.version = 11 : i64} {
  func.func @_loss_kernel(%arg0: i32, %arg1: i32, %arg2: i32, %arg3: memref<8x384xf32, #tpu.memory_space<vmem>>, %arg4: memref<8x384xf32, #tpu.memory_space<vmem>>, %arg5: memref<8x384xi8, #tpu.memory_space<vmem>>, %arg6: memref<1x8x128xf32, #tpu.memory_space<vmem>>, %arg7: memref<1x1xf32, #tpu.memory_space<vmem>>, %arg8: memref<1x1xf32, #tpu.memory_space<vmem>>) attributes {dimension_semantics = [#tpu.dimension_semantics<parallel>, #tpu.dimension_semantics<arbitrary>, #tpu.dimension_semantics<arbitrary>], iteration_bounds = array<i64: 1, 1, 1>, scalar_prefetch = 0 : i64, scratch_operands = 2 : i64, tpu.core_type = #tpu.core_type<tc>, window_params = [{transform_indices = @transform_0, window_bounds = array<i64: 8, 384>}, {transform_indices = @transform_1, window_bounds = array<i64: 8, 384>}, {transform_indices = @transform_2, window_bounds = array<i64: 8, 384>}, {transform_indices = @transform_3, window_bounds = array<i64: 1, 8, 128>}]} {
    %c0_i32 = arith.constant 0 : i32
    %0 = arith.cmpi eq, %arg1, %c0_i32 : i32
    %c0_i32_0 = arith.constant 0 : i32
    %1 = arith.cmpi eq, %arg2, %c0_i32_0 : i32
    %2 = arith.andi %0, %1 : i1
    %3 = arith.extui %2 : i1 to i32
    %c0_i32_1 = arith.constant 0 : i32
    %4 = arith.cmpi ne, %3, %c0_i32_1 : i32
    scf.if %4 {
      %cst = arith.constant 0.000000e+00 : f32
      %18 = vector.broadcast %cst : f32 to vector<1x1xf32>
      %c0 = arith.constant 0 : index
      %c0_8 = arith.constant 0 : index
      %19 = vector.load %arg7[%c0, %c0_8] : memref<1x1xf32, #tpu.memory_space<vmem>>, vector<1x1xf32>
      tpu.vector_store %arg7[%c0, %c0_8], %18 {strides = array<i32>} : memref<1x1xf32, #tpu.memory_space<vmem>>, vector<1x1xf32>,
      %cst_9 = arith.constant 0.000000e+00 : f32
      %20 = vector.broadcast %cst_9 : f32 to vector<1x1xf32>
      %c0_10 = arith.constant 0 : index
      %c0_11 = arith.constant 0 : index
      %21 = vector.load %arg8[%c0_10, %c0_11] : memref<1x1xf32, #tpu.memory_space<vmem>>, vector<1x1xf32>
      tpu.vector_store %arg8[%c0_10, %c0_11], %20 {strides = array<i32>} : memref<1x1xf32, #tpu.memory_space<vmem>>, vector<1x1xf32>,
    } else {
    }
    %c1_i32 = arith.constant 1 : i32
    %5 = arith.muli %arg0, %c1_i32 : i32
    %6 = arith.addi %5, %arg2 : i32
    %c0_i32_2 = arith.constant 0 : i32
    %7 = arith.cmpi sge, %6, %c0_i32_2 : i32
    %8 = arith.extui %7 : i1 to i32
    %c0_i32_3 = arith.constant 0 : i32
    %9 = arith.cmpi ne, %8, %c0_i32_3 : i32
    scf.if %9 {
      %c0 = arith.constant 0 : index
      %c0_8 = arith.constant 0 : index
      %18 = vector.load %arg3[%c0, %c0_8] : memref<8x384xf32, #tpu.memory_space<vmem>>, vector<8x384xf32>
      %c0_9 = arith.constant 0 : index
      %c0_10 = arith.constant 0 : index
      %19 = vector.load %arg4[%c0_9, %c0_10] : memref<8x384xf32, #tpu.memory_space<vmem>>, vector<8x384xf32>
      %c0_11 = arith.constant 0 : index
      %c0_12 = arith.constant 0 : index
      %20 = vector.load %arg5[%c0_11, %c0_12] : memref<8x384xi8, #tpu.memory_space<vmem>>, vector<8x384xi8>
      %c0_i8 = arith.constant 0 : i8
      %21 = vector.broadcast %c0_i8 : i8 to vector<8x384xi8>
      %22 = arith.cmpi ne, %20, %21 : vector<8x384xi8>
      %c384_i32 = arith.constant 384 : i32
      %23 = arith.muli %6, %c384_i32 : i32
      %24 = tpu.iota {dimensions = array<i32: 1>} : vector<8x384xi32>
      %25 = vector.broadcast %23 : i32 to vector<8x384xi32>
      %26 = arith.addi %25, %24 : vector<8x384xi32>
      %c300_i32 = arith.constant 300 : i32
      %27 = vector.broadcast %c300_i32 : i32 to vector<8x384xi32>
      %28 = arith.cmpi slt, %26, %27 : vector<8x384xi32>
      %29 = arith.andi %22, %28 : vector<8x384xi1>
      %30 = arith.subf %18, %19 : vector<8x384xf32>
      %31 = math.absf %30 : vector<8x384xf32>
      %cst = arith.constant 0.000000e+00 : f32
      %32 = vector.broadcast %cst : f32 to vector<8x384xf32>
      %33 = arith.cmpf ole, %18, %32 : vector<8x384xf32>
      %cst_13 = arith.constant 0.000000e+00 : f32
      %34 = vector.broadcast %cst_13 : f32 to vector<8x384xf32>
      %35 = arith.cmpf ole, %19, %34 : vector<8x384xf32>
      %36 = arith.andi %33, %35 : vector<8x384xi1>
      %cst_14 = arith.constant 1.000000e+00 : f32
      %37 = vector.broadcast %cst_14 : f32 to vector<8x384xf32>
      %38 = arith.cmpf oge, %18, %37 : vector<8x384xf32>
      %cst_15 = arith.constant 1.000000e+00 : f32
      %39 = vector.broadcast %cst_15 : f32 to vector<8x384xf32>
      %40 = arith.cmpf oge, %19, %39 : vector<8x384xf32>
      %41 = arith.andi %38, %40 : vector<8x384xi1>
      %42 = arith.ori %36, %41 : vector<8x384xi1>
      %cst_16 = arith.constant 0.000000e+00 : f32
      %43 = vector.broadcast %cst_16 : f32 to vector<8x384xf32>
      %44 = arith.select %42, %43, %31 : vector<8x384xi1>, vector<8x384xf32>
      %45 = arith.cmpf one, %44, %44 : vector<8x384xf32>
      %cst_17 = arith.constant dense<true> : vector<8x384xi1>
      %46 = arith.xori %45, %cst_17 : vector<8x384xi1>
      %47 = arith.andi %29, %46 : vector<8x384xi1>
      %cst_18 = arith.constant 0.000000e+00 : f32
      %48 = vector.broadcast %cst_18 : f32 to vector<8x384xf32>
      %49 = arith.select %47, %44, %48 : vector<8x384xi1>, vector<8x384xf32>
      %cst_19 = arith.constant dense<0.000000e+00> : vector<8xf32>
      %50 = vector.multi_reduction <add>, %49, %cst_19 [1] : vector<8x384xf32> to vector<8xf32>
      %51 = vector.shape_cast %50 : vector<8xf32> to vector<8x1xf32>
      %52 = arith.extui %47 : vector<8x384xi1> to vector<8x384xi32>
      %53 = arith.sitofp %52 : vector<8x384xi32> to vector<8x384xf32>
      %cst_20 = arith.constant dense<0.000000e+00> : vector<8xf32>
      %54 = vector.multi_reduction <add>, %53, %cst_20 [1] : vector<8x384xf32> to vector<8xf32>
      %55 = vector.shape_cast %54 : vector<8xf32> to vector<8x1xf32>
      %c0_21 = arith.constant 0 : index
      %c0_22 = arith.constant 0 : index
      %56 = vector.load %arg7[%c0_21, %c0_22] : memref<1x1xf32, #tpu.memory_space<vmem>>, vector<1x1xf32>
      %cst_23 = arith.constant dense<0.000000e+00> : vector<1xf32>
      %57 = vector.multi_reduction <add>, %51, %cst_23 [0] : vector<8x1xf32> to vector<1xf32>
      %58 = vector.shape_cast %57 : vector<1xf32> to vector<1x1xf32>
      %59 = arith.addf %56, %58 : vector<1x1xf32>
      %c0_24 = arith.constant 0 : index
      %c0_25 = arith.constant 0 : index
      %60 = vector.load %arg7[%c0_24, %c0_25] : memref<1x1xf32, #tpu.memory_space<vmem>>, vector<1x1xf32>
      tpu.vector_store %arg7[%c0_24, %c0_25], %59 {strides = array<i32>} : memref<1x1xf32, #tpu.memory_space<vmem>>, vector<1x1xf32>,
      %c0_26 = arith.constant 0 : index
      %c0_27 = arith.constant 0 : index
      %61 = vector.load %arg8[%c0_26, %c0_27] : memref<1x1xf32, #tpu.memory_space<vmem>>, vector<1x1xf32>
      %cst_28 = arith.constant dense<0.000000e+00> : vector<1xf32>
      %62 = vector.multi_reduction <add>, %55, %cst_28 [0] : vector<8x1xf32> to vector<1xf32>
      %63 = vector.shape_cast %62 : vector<1xf32> to vector<1x1xf32>
      %64 = arith.addf %61, %63 : vector<1x1xf32>
      %c0_29 = arith.constant 0 : index
      %c0_30 = arith.constant 0 : index
      %65 = vector.load %arg8[%c0_29, %c0_30] : memref<1x1xf32, #tpu.memory_space<vmem>>, vector<1x1xf32>
      tpu.vector_store %arg8[%c0_29, %c0_30], %64 {strides = array<i32>} : memref<1x1xf32, #tpu.memory_space<vmem>>, vector<1x1xf32>,
    } else {
    }
    %true = arith.constant true
    %10 = arith.xori %7, %true : i1
    %11 = arith.extui %10 : i1 to i32
    %c0_i32_4 = arith.constant 0 : i32
    %12 = arith.cmpi ne, %11, %c0_i32_4 : i32
    scf.if %12 {
      %c0 = arith.constant 0 : index
      %c0_8 = arith.constant 0 : index
      %18 = vector.load %arg3[%c0, %c0_8] : memref<8x384xf32, #tpu.memory_space<vmem>>, vector<8x384xf32>
      %c0_9 = arith.constant 0 : index
      %c0_10 = arith.constant 0 : index
      %19 = vector.load %arg4[%c0_9, %c0_10] : memref<8x384xf32, #tpu.memory_space<vmem>>, vector<8x384xf32>
      %c0_11 = arith.constant 0 : index
      %c0_12 = arith.constant 0 : index
      %20 = vector.load %arg5[%c0_11, %c0_12] : memref<8x384xi8, #tpu.memory_space<vmem>>, vector<8x384xi8>
      %c0_i8 = arith.constant 0 : i8
      %21 = vector.broadcast %c0_i8 : i8 to vector<8x384xi8>
      %22 = arith.cmpi ne, %20, %21 : vector<8x384xi8>
      %23 = arith.subf %18, %19 : vector<8x384xf32>
      %24 = math.absf %23 : vector<8x384xf32>
      %cst = arith.constant 0.000000e+00 : f32
      %25 = vector.broadcast %cst : f32 to vector<8x384xf32>
      %26 = arith.cmpf ole, %18, %25 : vector<8x384xf32>
      %cst_13 = arith.constant 0.000000e+00 : f32
      %27 = vector.broadcast %cst_13 : f32 to vector<8x384xf32>
      %28 = arith.cmpf ole, %19, %27 : vector<8x384xf32>
      %29 = arith.andi %26, %28 : vector<8x384xi1>
      %cst_14 = arith.constant 1.000000e+00 : f32
      %30 = vector.broadcast %cst_14 : f32 to vector<8x384xf32>
      %31 = arith.cmpf oge, %18, %30 : vector<8x384xf32>
      %cst_15 = arith.constant 1.000000e+00 : f32
      %32 = vector.broadcast %cst_15 : f32 to vector<8x384xf32>
      %33 = arith.cmpf oge, %19, %32 : vector<8x384xf32>
      %34 = arith.andi %31, %33 : vector<8x384xi1>
      %35 = arith.ori %29, %34 : vector<8x384xi1>
      %cst_16 = arith.constant 0.000000e+00 : f32
      %36 = vector.broadcast %cst_16 : f32 to vector<8x384xf32>
      %37 = arith.select %35, %36, %24 : vector<8x384xi1>, vector<8x384xf32>
      %38 = arith.cmpf one, %37, %37 : vector<8x384xf32>
      %cst_17 = arith.constant dense<true> : vector<8x384xi1>
      %39 = arith.xori %38, %cst_17 : vector<8x384xi1>
      %40 = arith.andi %22, %39 : vector<8x384xi1>
      %cst_18 = arith.constant 0.000000e+00 : f32
      %41 = vector.broadcast %cst_18 : f32 to vector<8x384xf32>
      %42 = arith.select %40, %37, %41 : vector<8x384xi1>, vector<8x384xf32>
      %cst_19 = arith.constant dense<0.000000e+00> : vector<8xf32>
      %43 = vector.multi_reduction <add>, %42, %cst_19 [1] : vector<8x384xf32> to vector<8xf32>
      %44 = vector.shape_cast %43 : vector<8xf32> to vector<8x1xf32>
      %45 = arith.extui %40 : vector<8x384xi1> to vector<8x384xi32>
      %46 = arith.sitofp %45 : vector<8x384xi32> to vector<8x384xf32>
      %cst_20 = arith.constant dense<0.000000e+00> : vector<8xf32>
      %47 = vector.multi_reduction <add>, %46, %cst_20 [1] : vector<8x384xf32> to vector<8xf32>
      %48 = vector.shape_cast %47 : vector<8xf32> to vector<8x1xf32>
      %c0_21 = arith.constant 0 : index
      %c0_22 = arith.constant 0 : index
      %49 = vector.load %arg7[%c0_21, %c0_22] : memref<1x1xf32, #tpu.memory_space<vmem>>, vector<1x1xf32>
      %cst_23 = arith.constant dense<0.000000e+00> : vector<1xf32>
      %50 = vector.multi_reduction <add>, %44, %cst_23 [0] : vector<8x1xf32> to vector<1xf32>
      %51 = vector.shape_cast %50 : vector<1xf32> to vector<1x1xf32>
      %52 = arith.addf %49, %51 : vector<1x1xf32>
      %c0_24 = arith.constant 0 : index
      %c0_25 = arith.constant 0 : index
      %53 = vector.load %arg7[%c0_24, %c0_25] : memref<1x1xf32, #tpu.memory_space<vmem>>, vector<1x1xf32>
      tpu.vector_store %arg7[%c0_24, %c0_25], %52 {strides = array<i32>} : memref<1x1xf32, #tpu.memory_space<vmem>>, vector<1x1xf32>,
      %c0_26 = arith.constant 0 : index
      %c0_27 = arith.constant 0 : index
      %54 = vector.load %arg8[%c0_26, %c0_27] : memref<1x1xf32, #tpu.memory_space<vmem>>, vector<1x1xf32>
      %cst_28 = arith.constant dense<0.000000e+00> : vector<1xf32>
      %55 = vector.multi_reduction <add>, %48, %cst_28 [0] : vector<8x1xf32> to vector<1xf32>
      %56 = vector.shape_cast %55 : vector<1xf32> to vector<1x1xf32>
      %57 = arith.addf %54, %56 : vector<1x1xf32>
      %c0_29 = arith.constant 0 : index
      %c0_30 = arith.constant 0 : index
      %58 = vector.load %arg8[%c0_29, %c0_30] : memref<1x1xf32, #tpu.memory_space<vmem>>, vector<1x1xf32>
      tpu.vector_store %arg8[%c0_29, %c0_30], %57 {strides = array<i32>} : memref<1x1xf32, #tpu.memory_space<vmem>>, vector<1x1xf32>,
    } else {
    }
    %c0_i32_5 = arith.constant 0 : i32
    %13 = arith.cmpi eq, %arg1, %c0_i32_5 : i32
    %c0_i32_6 = arith.constant 0 : i32
    %14 = arith.cmpi eq, %arg2, %c0_i32_6 : i32
    %15 = arith.andi %13, %14 : i1
    %16 = arith.extui %15 : i1 to i32
    %c0_i32_7 = arith.constant 0 : i32
    %17 = arith.cmpi ne, %16, %c0_i32_7 : i32
    scf.if %17 {
      %18 = tpu.iota {dimensions = array<i32: 0>} : vector<8x128xi32>
      %19 = tpu.iota {dimensions = array<i32: 1>} : vector<8x128xi32>
      %c0_i32_8 = arith.constant 0 : i32
      %20 = vector.broadcast %c0_i32_8 : i32 to vector<8x128xi32>
      %21 = arith.cmpi eq, %18, %20 : vector<8x128xi32>
      %c0_i32_9 = arith.constant 0 : i32
      %22 = vector.broadcast %c0_i32_9 : i32 to vector<8x128xi32>
      %23 = arith.cmpi eq, %19, %22 : vector<8x128xi32>
      %24 = arith.andi %21, %23 : vector<8x128xi1>
      %c0 = arith.constant 0 : index
      %c0_10 = arith.constant 0 : index
      %25 = vector.load %arg7[%c0, %c0_10] : memref<1x1xf32, #tpu.memory_space<vmem>>, vector<1x1xf32>
      %c1_i32_11 = arith.constant 1 : i32
      %26 = vector.broadcast %c1_i32_11 : i32 to vector<8x128xi32>
      %27 = arith.cmpi eq, %19, %26 : vector<8x128xi32>
      %28 = arith.andi %21, %27 : vector<8x128xi1>
      %c0_12 = arith.constant 0 : index
      %c0_13 = arith.constant 0 : index
      %29 = vector.load %arg8[%c0_12, %c0_13] : memref<1x1xf32, #tpu.memory_space<vmem>>, vector<1x1xf32>
      %cst = arith.constant 0.000000e+00 : f32
      %30 = vector.shape_cast %29 : vector<1x1xf32> to vector<1x1xf32>
      %31 = vector.broadcast %30 : vector<1x1xf32> to vector<8x128xf32>
      %32 = vector.broadcast %cst : f32 to vector<8x128xf32>
      %33 = arith.select %28, %31, %32 : vector<8x128xi1>, vector<8x128xf32>
      %34 = vector.shape_cast %25 : vector<1x1xf32> to vector<1x1xf32>
      %35 = vector.broadcast %34 : vector<1x1xf32> to vector<8x128xf32>
      %36 = arith.select %24, %35, %33 : vector<8x128xi1>, vector<8x128xf32>
      %c0_14 = arith.constant 0 : index
      %c0_15 = arith.constant 0 : index
      %c0_16 = arith.constant 0 : index
      %37 = vector.load %arg6[%c0_14, %c0_15, %c0_16] : memref<1x8x128xf32, #tpu.memory_space<vmem>>, vector<1x8x128xf32>
      %38 = vector.shape_cast %37 : vector<1x8x128xf32> to vector<8x128xf32>
      %39 = vector.shape_cast %36 : vector<8x128xf32> to vector<1x8x128xf32>
      tpu.vector_store %arg6[%c0_14, %c0_15, %c0_16], %39 {strides = array<i32>} : memref<1x8x128xf32, #tpu.memory_space<vmem>>, vector<1x8x128xf32>,
    } else {
    }
    return
  }
  func.func @transform_0(%arg0: i32, %arg1: i32, %arg2: i32) -> (i32, i32) {
    %c1_i32 = arith.constant 1 : i32
    %0 = arith.muli %arg0, %c1_i32 : i32
    %1 = arith.addi %0, %arg2 : i32
    %c0_i32 = arith.constant 0 : i32
    %2 = arith.minsi %1, %c0_i32 : i32
    %c0_i32_0 = arith.constant 0 : i32
    return %arg1, %2 : i32, i32
  }
  func.func @transform_1(%arg0: i32, %arg1: i32, %arg2: i32) -> (i32, i32) {
    %c1_i32 = arith.constant 1 : i32
    %0 = arith.muli %arg0, %c1_i32 : i32
    %1 = arith.addi %0, %arg2 : i32
    %c0_i32 = arith.constant 0 : i32
    %2 = arith.minsi %1, %c0_i32 : i32
    %c0_i32_0 = arith.constant 0 : i32
    return %arg1, %2 : i32, i32
  }
  func.func @transform_2(%arg0: i32, %arg1: i32, %arg2: i32) -> (i32, i32) {
    %c1_i32 = arith.constant 1 : i32
    %0 = arith.muli %arg0, %c1_i32 : i32
    %1 = arith.addi %0, %arg2 : i32
    %c0_i32 = arith.constant 0 : i32
    %2 = arith.minsi %1, %c0_i32 : i32
    %c0_i32_0 = arith.constant 0 : i32
    return %arg1, %2 : i32, i32
  }
  func.func @transform_3(%arg0: i32, %arg1: i32, %arg2: i32) -> (i32, i32, i32) {
    %c0_i32 = arith.constant 0 : i32
    %c0_i32_0 = arith.constant 0 : i32
    %c0_i32_1 = arith.constant 0 : i32
    return %arg0, %c0_i32, %c0_i32_0 : i32, i32, i32
  }
}

</mosaic_0001>

<llo_original>
// kernel: tpu_custom_call.1
$region0: #{tpu_custom_call.1}
  #allocation0 [shape = 'u32[]', space=smem, size = 0x4, offset = 0x4, fixed_abs, tag = 'smem constant byte address 0x4 - core index']
  #allocation1 [shape = 'u32[144,128]{1,0:T(1,128)}', space=vmem, size = 0x12000, scoped, tag = 'internal scratch']
  #allocation2 [shape = 'f32[1,1]{1,0:T(1,128)}', space=vmem, size = 0x200, scoped, tag = 'scratch operand']
  #allocation3 [shape = 'f32[1,1]{1,0:T(1,128)}', space=vmem, size = 0x200, scoped, tag = 'scratch operand']
  %s0 = inlined_call_operand.hbm [shape: f32[8,300], index: 0, kind: input, shape index: {}]
  %s1 = inlined_call_operand.hbm [shape: f32[8,300], index: 1, kind: input, shape index: {}]
  %s2 = inlined_call_operand.hbm [shape: s8[8,300], index: 2, kind: input, shape index: {}]
  %s3 = inlined_call_operand.hbm [shape: f32[1,8,128], index: 3, kind: output, shape index: {}]
  %s4 = sld [smem:[#allocation0]]
  $region50: #{tpu_custom_call.1} parent=0
    _
  %s6 = ssub.s32 1, %s4
  %s7 = scalar_select 0, %s6, %s4
  $region1: #{tpu_custom_call.1} parent=0
    #allocation4 [shape = 'u8[12288]{0}', space=vmem, size = 0x3000, scoped, tag = 'input window, operand 0, single buffered']
    #allocation5 [shape = 's32[1]{0}', space=sflag, size = 0x4, scoped, tag = 'scoped memory for tpu_custom_call.1']
    #allocation6 [shape = 's32[1]{0}', space=sflag, size = 0x4, scoped, tag = 'scoped memory for tpu_custom_call.1']
    #allocation7 [shape = 'u8[12288]{0}', space=vmem, size = 0x3000, scoped, tag = 'input window, operand 1, single buffered']
    #allocation8 [shape = 's32[1]{0}', space=sflag, size = 0x4, scoped, tag = 'scoped memory for tpu_custom_call.1']
    #allocation9 [shape = 'u8[3072]{0}', space=vmem, size = 0xc00, scoped, tag = 'input window, operand 2, single buffered']
    #allocation10 [shape = 'u8[4096]{0}', space=vmem, size = 0x1000, scoped, tag = 'output window, operand 0, single buffered']
    %8 = vsyncpa [#allocation5], 0
    %9 = vsyncpa [#allocation8], 0
    %10 = vsyncpa [#allocation6], 0
    // Predicated region
    $region2: #{tpu_custom_call.1} parent=1 // pred_check
      _
    $region3: #{tpu_custom_call.1} parent=1 // pred_check_branch
      %12 = sbr.rel (0) target = $region5
    $region4: #{tpu_custom_call.1} parent=1 // pred_region
      %s13 = sadd.s32 0, 0
      %p14 = scmp.lt.s32.totalorder %s13, 0
      %s15 = scalar_select %p14, %s13, 0
      %s16 = smul.u32 3, %s15
      %s18 = ssub.s32 384, 384
      %19 = vsyncadd [#allocation5], %s18
      %s20 = smul.addr %s16, 128
      %s21 = scalar_lea.hbm %s0, %s20
      %s23 = sshll.u32 [#allocation4], 4
      %s24 = int_to_ptr.vmem [resolvable:$true] %s23
      %26 = dma.hbm_to_vmem [thread:$0]  %s21, 384, %s24, [#allocation5]
    $region5: #{tpu_custom_call.1} parent=1 // pred_fallthru
      _
    // Predicated region
    $region6: #{tpu_custom_call.1} parent=1 // pred_check
      _
    $region7: #{tpu_custom_call.1} parent=1 // pred_check_branch
      %28 = sbr.rel (0) target = $region9
    $region8: #{tpu_custom_call.1} parent=1 // pred_region
      %s29 = sadd.s32 0, 0
      %p30 = scmp.lt.s32.totalorder %s29, 0
      %s31 = scalar_select %p30, %s29, 0
      %s32 = smul.u32 3, %s31
      %s34 = ssub.s32 384, 384
      %35 = vsyncadd [#allocation8], %s34
      %s36 = smul.addr %s32, 128
      %s37 = scalar_lea.hbm %s1, %s36
      %s39 = sshll.u32 [#allocation7], 4
      %s40 = int_to_ptr.vmem [resolvable:$true] %s39
      %42 = dma.hbm_to_vmem [thread:$0]  %s37, 384, %s40, [#allocation8]
    $region9: #{tpu_custom_call.1} parent=1 // pred_fallthru
      _
    // Predicated region
    $region10: #{tpu_custom_call.1} parent=1 // pred_check
      _
    $region11: #{tpu_custom_call.1} parent=1 // pred_check_branch
      %44 = sbr.rel (0) target = $region13
    $region12: #{tpu_custom_call.1} parent=1 // pred_region
      %s45 = sadd.s32 0, 0
      %p46 = scmp.lt.s32.totalorder %s45, 0
      %s47 = scalar_select %p46, %s45, 0
      %s48 = smul.u32 3, %s47
      %s50 = ssub.s32 96, 96
      %51 = vsyncadd [#allocation8], %s50
      %s52 = smul.addr %s48, 32
      %s53 = scalar_lea.hbm %s2, %s52
      %s55 = sshll.u32 [#allocation9], 4
      %s56 = int_to_ptr.vmem [resolvable:$true] %s55
      %58 = dma.hbm_to_vmem [thread:$0]  %s53, 96, %s56, [#allocation8]
    $region13: #{tpu_custom_call.1} parent=1 // pred_fallthru
      _
    // Predicated region
    $region14: #{tpu_custom_call.1} parent=1 // pred_check
      _
    $region15: #{tpu_custom_call.1} parent=1 // pred_check_branch
      %60 = sbr.rel (0) target = $region17
    $region16: #{tpu_custom_call.1} parent=1 // pred_region
      %61 = dma.done [#allocation5], 384
    $region17: #{tpu_custom_call.1} parent=1 // pred_fallthru
      _
    // Predicated region
    $region18: #{tpu_custom_call.1} parent=1 // pred_check
      _
    $region19: #{tpu_custom_call.1} parent=1 // pred_check_branch
      %63 = sbr.rel (0) target = $region21
    $region20: #{tpu_custom_call.1} parent=1 // pred_region
      %64 = dma.done [#allocation8], 384
    $region21: #{tpu_custom_call.1} parent=1 // pred_fallthru
      _
    // Predicated region
    $region22: #{tpu_custom_call.1} parent=1 // pred_check
      _
    $region23: #{tpu_custom_call.1} parent=1 // pred_check_branch
      %66 = sbr.rel (0) target = $region25
    $region24: #{tpu_custom_call.1} parent=1 // pred_region
      %67 = dma.done [#allocation8], 96
    $region25: #{tpu_custom_call.1} parent=1 // pred_fallthru
      _
    %s68 = sadd.s32 0, 0
    %p69 = scmp.lt.s32.totalorder %s68, 0
    %s70 = scalar_select %p69, %s68, 0
    %s71 = smul.u32 3, %s70
    %s72 = sadd.s32 0, 0
    %p73 = scmp.lt.s32.totalorder %s72, 0
    %s74 = scalar_select %p73, %s72, 0
    %s75 = smul.u32 3, %s74
    %s76 = sadd.s32 0, 0
    %p77 = scmp.lt.s32.totalorder %s76, 0
    %s78 = scalar_select %p77, %s76, 0
    %s79 = smul.u32 3, %s78
    %p82 = scmp.eq.s32.totalorder 0, 0
    %p83 = scmp.eq.s32.totalorder 0, 0
    %p84 = pnand %p82, %p83
    %p85 = pneg %p84
    // Predicated region
    $region26: #{tpu_custom_call.1} parent=1 // pred_check
      _
    $region27: #{tpu_custom_call.1} parent=1 // pred_check_branch
      %87 = sbr.rel (%p84) target = $region29
    $region28: #{tpu_custom_call.1} parent=1 // pred_region
      %vm88 = vcmask 0
      %89 = vst.msk [vmem:[#allocation2] sm:$0x1] %vm88, 0.0
      %90 = vst.msk [vmem:[#allocation3] sm:$0x1] %vm88, 0.0
    $region29: #{tpu_custom_call.1} parent=1 // pred_fallthru
      _
    %s91 = sadd.s32 0, 0
    %p92 = scmp.ge.s32.totalorder %s91, 0
    // Predicated region
    $region30: #{tpu_custom_call.1} parent=1 // pred_check
      %p93 = pneg %p92
    $region31: #{tpu_custom_call.1} parent=1 // pred_check_branch
      %95 = sbr.rel (%p93) target = $region33
    $region32: #{tpu_custom_call.1} parent=1 // pred_region
      %v96 = vld [vmem:[#allocation4] sm:$0xff]
      %v97 = vld [vmem:[#allocation4 + $0x8] sm:$0xff]
      %v98 = vld [vmem:[#allocation4 + $0x10] sm:$0xff]
      %v99 = vld [vmem:[#allocation7] sm:$0xff]
      %v100 = vld [vmem:[#allocation7 + $0x8] sm:$0xff]
      %v101 = vld [vmem:[#allocation7 + $0x10] sm:$0xff]
      %v102 = vld [vmem:[#allocation9] sm:$0x3f]
      %vm103 = vnez %v102
      %s104 = smul.u32 %s91, 384
      %v105 = vlaneseq
      %v106 = vand.u32 %v105, 127
      %v107 = vadd.s32 %v106, 128
      %v108 = vadd.s32 %v106, 256
      %v109 = vstv %s104
      %v110 = vadd.s32 %v109, %v106
      %v111 = vadd.s32 %v109, %v107
      %v112 = vadd.s32 %v109, %v108
      %vm113 = vcmp.lt.s32.totalorder %v110, 300
      %vm114 = vcmp.lt.s32.totalorder %v111, 300
      %vm115 = vcmp.lt.s32.totalorder %v112, 300
      %vm116 = vmpackc.low %vm114, %vm113
      %vm117 = vmpackc.low %vm115, %vm115
      %vm118 = vmpackc.even %vm117, %vm116
      %vm119 = vmand %vm103, %vm118
      %v120 = vsub.f32 %v96, %v99
      %v121 = vsub.f32 %v97, %v100
      %v122 = vsub.f32 %v98, %v101
      %v123 = vand.u32 2147483647, %v120
      %v124 = vand.u32 2147483647, %v121
      %v125 = vand.u32 2147483647, %v122
      %vm126 = vcmp.le.f32.partialorder %v96, 0.0
      %vm127 = vcmp.le.f32.partialorder %v97, 0.0
      %vm128 = vcmp.le.f32.partialorder %v98, 0.0
      %vm129 = vcmp.le.f32.partialorder %v99, 0.0
      %vm130 = vcmp.le.f32.partialorder %v100, 0.0
      %vm131 = vcmp.le.f32.partialorder %v101, 0.0
      %vm132 = vmand %vm126, %vm129
      %vm133 = vmand %vm127, %vm130
      %vm134 = vmand %vm128, %vm131
      %vm135 = vcmp.ge.f32.partialorder %v96, 1.0
      %vm136 = vcmp.ge.f32.partialorder %v97, 1.0
      %vm137 = vcmp.ge.f32.partialorder %v98, 1.0
      %vm138 = vcmp.ge.f32.partialorder %v99, 1.0
      %vm139 = vcmp.ge.f32.partialorder %v100, 1.0
      %vm140 = vcmp.ge.f32.partialorder %v101, 1.0
      %vm141 = vmand %vm135, %vm138
      %vm142 = vmand %vm136, %vm139
      %vm143 = vmand %vm137, %vm140
      %vm144 = vmor %vm132, %vm141
      %vm145 = vmor %vm133, %vm142
      %vm146 = vmor %vm134, %vm143
      %v147 = vsel %vm144, 0.0, %v123
      %v148 = vsel %vm145, 0.0, %v124
      %v149 = vsel %vm146, 0.0, %v125
      %vm150 = vcmp.ne.f32.partialorder %v147, %v147
      %vm151 = vcmp.ne.f32.partialorder %v148, %v148
      %vm152 = vcmp.ne.f32.partialorder %v149, %v149
      %vm153 = vmxor %vm150, 1
      %vm154 = vmxor %vm151, 1
      %vm155 = vmxor %vm152, 1
      %vm156 = vmpackc.low %vm154, %vm153
      %vm157 = vmpackc.low %vm155, %vm155
      %vm158 = vmpackc.even %vm157, %vm156
      %vm159 = vmand %vm119, %vm158
      %v160 = vsel %vm159, 16843009, 0
      %v161 = vunpack.c.0.s8 %v160
      %v162 = vunpack.c.1.s8 %v160
      %v163 = vunpack.c.2.s8 %v160
      %vm164 = vcmp.ne.s32.totalorder %v161, 0
      %vm165 = vcmp.ne.s32.totalorder %v162, 0
      %vm166 = vcmp.ne.s32.totalorder %v163, 0
      %v167 = vsel %vm164, %v147, 0.0
      %v168 = vsel %vm165, %v148, 0.0
      %v169 = vsel %vm166, %v149, 0.0
      %v170 = vadd.f32 %v167, %v168
      %v171 = vadd.f32 %v170, %v169
      %172 = vadd.xlane.f32.xlu0 %v171
      %v173 = vpop.xlane.xlu0 %172
      %v174 = vsel %vm164, 1, 0
      %v175 = vsel %vm165, 1, 0
      %v176 = vsel %vm166, 1, 0
      %v177 = vcvt.s32.f32 %v174
      %v178 = vcvt.s32.f32 %v175
      %v179 = vcvt.s32.f32 %v176
      %v180 = vadd.f32 %v177, %v178
      %v181 = vadd.f32 %v180, %v179
      %182 = vadd.xlane.f32.xlu0 %v181
      %v183 = vpop.xlane.xlu0 %182
      %v184 = vld [vmem:[#allocation2] sm:$0x1]
      %v185 = vrot.slane %v173, 4
      %v186 = vadd.f32 %v173, %v185
      %v187 = vrot.slane %v186, 2
      %v188 = vadd.f32 %v186, %v187
      %v189 = vrot.slane %v188, 1
      %v190 = vadd.f32 %v188, %v189
      %v191 = vadd.f32 %v184, %v190
      %vm192 = vcmask 0
      %193 = vst.msk [vmem:[#allocation2] sm:$0x1] %vm192, %v191
      %v194 = vld [vmem:[#allocation3] sm:$0x1]
      %v195 = vrot.slane %v183, 4
      %v196 = vadd.f32 %v183, %v195
      %v197 = vrot.slane %v196, 2
      %v198 = vadd.f32 %v196, %v197
      %v199 = vrot.slane %v198, 1
      %v200 = vadd.f32 %v198, %v199
      %v201 = vadd.f32 %v194, %v200
      %202 = vst.msk [vmem:[#allocation3] sm:$0x1] %vm192, %v201
    $region33: #{tpu_custom_call.1} parent=1 // pred_fallthru
      _
    %p203 = scmp.lt.s32.totalorder %s91, 0
    // Predicated region
    $region34: #{tpu_custom_call.1} parent=1 // pred_check
      %p204 = pneg %p203
    $region35: #{tpu_custom_call.1} parent=1 // pred_check_branch
      %206 = sbr.rel (%p204) target = $region37
    $region36: #{tpu_custom_call.1} parent=1 // pred_region
      %v207 = vld [vmem:[#allocation4] sm:$0xff]
      %v208 = vld [vmem:[#allocation4 + $0x8] sm:$0xff]
      %v209 = vld [vmem:[#allocation4 + $0x10] sm:$0xff]
      %v210 = vld [vmem:[#allocation7] sm:$0xff]
      %v211 = vld [vmem:[#allocation7 + $0x8] sm:$0xff]
      %v212 = vld [vmem:[#allocation7 + $0x10] sm:$0xff]
      %v213 = vld [vmem:[#allocation9] sm:$0x3f]
      %vm214 = vnez %v213
      %v215 = vsub.f32 %v207, %v210
      %v216 = vsub.f32 %v208, %v211
      %v217 = vsub.f32 %v209, %v212
      %v218 = vand.u32 2147483647, %v215
      %v219 = vand.u32 2147483647, %v216
      %v220 = vand.u32 2147483647, %v217
      %vm221 = vcmp.le.f32.partialorder %v207, 0.0
      %vm222 = vcmp.le.f32.partialorder %v208, 0.0
      %vm223 = vcmp.le.f32.partialorder %v209, 0.0
      %vm224 = vcmp.le.f32.partialorder %v210, 0.0
      %vm225 = vcmp.le.f32.partialorder %v211, 0.0
      %vm226 = vcmp.le.f32.partialorder %v212, 0.0
      %vm227 = vmand %vm221, %vm224
      %vm228 = vmand %vm222, %vm225
      %vm229 = vmand %vm223, %vm226
      %vm230 = vcmp.ge.f32.partialorder %v207, 1.0
      %vm231 = vcmp.ge.f32.partialorder %v208, 1.0
      %vm232 = vcmp.ge.f32.partialorder %v209, 1.0
      %vm233 = vcmp.ge.f32.partialorder %v210, 1.0
      %vm234 = vcmp.ge.f32.partialorder %v211, 1.0
      %vm235 = vcmp.ge.f32.partialorder %v212, 1.0
      %vm236 = vmand %vm230, %vm233
      %vm237 = vmand %vm231, %vm234
      %vm238 = vmand %vm232, %vm235
      %vm239 = vmor %vm227, %vm236
      %vm240 = vmor %vm228, %vm237
      %vm241 = vmor %vm229, %vm238
      %v242 = vsel %vm239, 0.0, %v218
      %v243 = vsel %vm240, 0.0, %v219
      %v244 = vsel %vm241, 0.0, %v220
      %vm245 = vcmp.ne.f32.partialorder %v242, %v242
      %vm246 = vcmp.ne.f32.partialorder %v243, %v243
      %vm247 = vcmp.ne.f32.partialorder %v244, %v244
      %vm248 = vmxor %vm245, 1
      %vm249 = vmxor %vm246, 1
      %vm250 = vmxor %vm247, 1
      %vm251 = vmpackc.low %vm249, %vm248
      %vm252 = vmpackc.low %vm250, %vm250
      %vm253 = vmpackc.even %vm252, %vm251
      %vm254 = vmand %vm214, %vm253
      %v255 = vsel %vm254, 16843009, 0
      %v256 = vunpack.c.0.s8 %v255
      %v257 = vunpack.c.1.s8 %v255
      %v258 = vunpack.c.2.s8 %v255
      %vm259 = vcmp.ne.s32.totalorder %v256, 0
      %vm260 = vcmp.ne.s32.totalorder %v257, 0
      %vm261 = vcmp.ne.s32.totalorder %v258, 0
      %v262 = vsel %vm259, %v242, 0.0
      %v263 = vsel %vm260, %v243, 0.0
      %v264 = vsel %vm261, %v244, 0.0
      %v265 = vadd.f32 %v262, %v263
      %v266 = vadd.f32 %v265, %v264
      %267 = vadd.xlane.f32.xlu0 %v266
      %v268 = vpop.xlane.xlu0 %267
      %v269 = vsel %vm259, 1, 0
      %v270 = vsel %vm260, 1, 0
      %v271 = vsel %vm261, 1, 0
      %v272 = vcvt.s32.f32 %v269
      %v273 = vcvt.s32.f32 %v270
      %v274 = vcvt.s32.f32 %v271
      %v275 = vadd.f32 %v272, %v273
      %v276 = vadd.f32 %v275, %v274
      %277 = vadd.xlane.f32.xlu0 %v276
      %v278 = vpop.xlane.xlu0 %277
      %v279 = vld [vmem:[#allocation2] sm:$0x1]
      %v280 = vrot.slane %v268, 4
      %v281 = vadd.f32 %v268, %v280
      %v282 = vrot.slane %v281, 2
      %v283 = vadd.f32 %v281, %v282
      %v284 = vrot.slane %v283, 1
      %v285 = vadd.f32 %v283, %v284
      %v286 = vadd.f32 %v279, %v285
      %vm287 = vcmask 0
      %288 = vst.msk [vmem:[#allocation2] sm:$0x1] %vm287, %v286
      %v289 = vld [vmem:[#allocation3] sm:$0x1]
      %v290 = vrot.slane %v278, 4
      %v291 = vadd.f32 %v278, %v290
      %v292 = vrot.slane %v291, 2
      %v293 = vadd.f32 %v291, %v292
      %v294 = vrot.slane %v293, 1
      %v295 = vadd.f32 %v293, %v294
      %v296 = vadd.f32 %v289, %v295
      %297 = vst.msk [vmem:[#allocation3] sm:$0x1] %vm287, %v296
    $region37: #{tpu_custom_call.1} parent=1 // pred_fallthru
      _
    // Predicated region
    $region38: #{tpu_custom_call.1} parent=1 // pred_check
      _
    $region39: #{tpu_custom_call.1} parent=1 // pred_check_branch
      %299 = sbr.rel (%p84) target = $region41
    $region40: #{tpu_custom_call.1} parent=1 // pred_region
      %v300 = vlaneseq
      %v301 = vshrl.u32 %v300, 7
      %v302 = vlaneseq
      %v303 = vand.u32 %v302, 127
      %vm304 = vcmp.eq.s32.totalorder %v301, 0
      %vm305 = vcmp.eq.s32.totalorder %v303, 0
      %vm306 = vmand %vm304, %vm305
      %v307 = vld [vmem:[#allocation2] sm:$0x1]
      %vm308 = vcmp.eq.s32.totalorder %v303, 1
      %vm309 = vmand %vm304, %vm308
      %v310 = vld [vmem:[#allocation3] sm:$0x1]
      %v312 = vlaneseq
      %v313 = vshrl.u32 %v312, 7
      %v314 = vsub.s32 0, %v313
      %v315 = vrot.slane %v310, %v314
      %316 = vset.pattern.permute.xlu0 0
      %317 = vperm.xlu0 %316, %v315
      %v318 = vpop.permute.xlu0 %317
      %v320 = vsel %vm309, %v318, 0.0
      %v322 = vlaneseq
      %v323 = vshrl.u32 %v322, 7
      %v324 = vsub.s32 0, %v323
      %v325 = vrot.slane %v307, %v324
      %326 = vset.pattern.permute.xlu0 0
      %327 = vperm.xlu0 %326, %v325
      %v328 = vpop.permute.xlu0 %327
      %v330 = vsel %vm306, %v328, %v320
      %331 = vst [vmem:[#allocation10] sm:$0xff] %v330
    $region41: #{tpu_custom_call.1} parent=1 // pred_fallthru
      _
    // Predicated region
    $region42: #{tpu_custom_call.1} parent=1 // pred_check
      _
    $region43: #{tpu_custom_call.1} parent=1 // pred_check_branch
      %333 = sbr.rel (0) target = $region45
    $region44: #{tpu_custom_call.1} parent=1 // pred_region
      %s335 = ssub.s32 128, 128
      %336 = vsyncadd [#allocation6], %s335
      %s338 = sshll.u32 [#allocation10], 4
      %s339 = int_to_ptr.vmem [resolvable:$true] %s338
      %341 = dma.vmem_to_hbm [thread:$0]  %s339, 128, %s3, [#allocation6]
    $region45: #{tpu_custom_call.1} parent=1 // pred_fallthru
      _
    // Predicated region
    $region46: #{tpu_custom_call.1} parent=1 // pred_check
      _
    $region47: #{tpu_custom_call.1} parent=1 // pred_check_branch
      %343 = sbr.rel (0) target = $region49
    $region48: #{tpu_custom_call.1} parent=1 // pred_region
      %344 = dma.done [#allocation6], 128
    $region49: #{tpu_custom_call.1} parent=1 // pred_fallthru
      _
    %345 = vsyncpa [#allocation5], 1
    %346 = vsyncpa [#allocation8], 1
    %347 = vsyncpa [#allocation6], 1

</llo_original>
